<compile_context>
chip_gen: v7x
topology: tpu7x:2x2x1
jax: 0.10.0
libtpu: 0.0.40
codegen_flags: <defaults>
</compile_context>

<pallas_src>
import functools
import math

import jax
import jax.numpy as jnp
from jax.experimental import pallas as pl
from jax.experimental.pallas import tpu as pltpu


def _round_up(n, m):
    return ((n + m - 1) // m) * m


def _cdiv(a, b):
    return (a + b - 1) // b


def _tensorcore_count():
    """2 TensorCores per chip on v7x, 1 on v5e/v6e. Best-effort detection."""
    try:
        kind = jax.devices()[0].device_kind.lower()
    except Exception:  # pragma: no cover - defensive
        return 1
    return 2 if ("v7" in kind or "7x" in kind) else 1


def _ae_kernel(x_ref,
               w1, b1, w2, b2, w3, b3,        # encoder params
               w4, b4, w5, b5, w6, b6,        # decoder params
               o_ref):
    """Whole AE forward for one batch tile, fully in VMEM."""
    cd = w1.dtype  # MXU input dtype (bf16 by default, f32 optional)

    def dense(h, w_ref, b_ref):
        # MXU matmul with f32 accumulation; bias add stays f32 on the VPU.
        y = jnp.dot(h.astype(cd), w_ref[...], preferred_element_type=jnp.float32)
        return y + b_ref[...]

    h = x_ref[...]                                   # (tm, Dp) float32

    # ---- encoder ----
    h = jnp.maximum(dense(h, w1, b1), 0.0)           # ReLU
    h = jnp.maximum(dense(h, w2, b2), 0.0)           # ReLU
    h = dense(h, w3, b3)
    # Sigmoid: exp runs on the EUP; the divide touches only a (tm, 16) tensor,
    # so it is negligible and kept exact (matches the f32 module semantics).
    z = 1.0 / (1.0 + jnp.exp(-h))

    # ---- decoder ----
    h = jnp.maximum(dense(z, w4, b4), 0.0)           # ReLU
    h = jnp.maximum(dense(h, w5, b5), 0.0)           # ReLU
    h = dense(h, w6, b6)

    o_ref[...] = h.astype(o_ref.dtype)


def ae_forward(x, params, *, tm=512, compute_dtype=jnp.bfloat16,
               out_dtype=jnp.float32):
    """x: (B, D) float32.  params: dict of (in,out) weights and (1,out) biases."""
    B, D = x.shape
    assert tm % 8 == 0, "batch tile must be a multiple of 8 sublanes"
    cd = jnp.dtype(compute_dtype)
    od = jnp.dtype(out_dtype)

    # ---- feature (lane) padding: make D a multiple of 128 so the first/last
    # matmuls and the output stores are lane-dense. Zero-padded rows of w1 /
    # zero columns of w6,b6 keep the math identical on the original D lanes.
    Dp = _round_up(D, 128)

    # ---- batch (sublane) tiling: pick the tile count first so tail padding
    # is bounded by < 8 rows per tile; on v7x force >= 2 tiles so the
    # "parallel" grid axis shards across both TensorCores.
    min_grid = 2 if (_tensorcore_count() >= 2 and B > 8) else 1
    n_tiles = max(_cdiv(B, tm), min_grid)
    tm_eff = _round_up(_cdiv(B, n_tiles), 8)
    Bp = n_tiles * tm_eff

    # No wrapper-side dtype cast of x (saves an HBM pass); only zero-pad.
    xp = x
    if Bp != B or Dp != D:
        xp = jnp.pad(x, ((0, Bp - B), (0, Dp - D)))

    # One-time param prep: weights feed the MXU at compute_dtype, biases f32.
    weights = [params[f"w{i}"] for i in range(1, 7)]
    biases = [params[f"b{i}"].astype(jnp.float32) for i in range(1, 7)]
    if Dp != D:
        weights[0] = jnp.pad(weights[0], ((0, Dp - D), (0, 0)))   # w1 rows
        weights[5] = jnp.pad(weights[5], ((0, 0), (0, Dp - D)))   # w6 cols
        biases[5] = jnp.pad(biases[5], ((0, 0), (0, Dp - D)))     # b6 cols
    weights = [w.astype(cd) for w in weights]
    flat_params = []
    for w, b in zip(weights, biases):
        flat_params += [w, b]

    def full_spec(a):
        # Constant block index => the block stays VMEM-resident across the grid
        # (the pipeline skips re-copies when the block index does not change).
        return pl.BlockSpec(a.shape, lambda i, _nd=a.ndim: (0,) * _nd)

    in_specs = [pl.BlockSpec((tm_eff, Dp), lambda i: (i, 0))]
    in_specs += [full_spec(p) for p in flat_params]
    out_specs = pl.BlockSpec((tm_eff, Dp), lambda i: (i, 0))

    # Advisory cost estimate so XLA can schedule surrounding ops sensibly.
    flops = 2 * Bp * sum(k * n for k, n in (w.shape for w in weights))
    param_bytes = sum(math.prod(p.shape) * p.dtype.itemsize for p in flat_params)
    bytes_accessed = Bp * Dp * 4 + param_bytes + Bp * Dp * od.itemsize
    cost = pl.CostEstimate(flops=flops,
                           transcendentals=Bp * 16,          # sigmoid exp
                           bytes_accessed=bytes_accessed)

    # VMEM budget from actual tiles (double-buffered in/out + intermediates),
    # with headroom; >= 32 MiB so v5e's 16 MiB default scope isn't the limiter
    # and capped at 48 MiB to stay under v7x's 64 MiB physical VMEM.
    act_cols = 128 + 64 + 16 + 64 + 128
    per_row = 2 * Dp * 4 + 2 * Dp * od.itemsize + 3 * 4 * (act_cols + Dp)
    vmem_est = tm_eff * per_row + 2 * param_bytes
    vmem_limit = int(min(max(2 * vmem_est, 32 << 20), 48 << 20))

    grid_spec = pltpu.PrefetchScalarGridSpec(
        num_scalar_prefetch=0,
        grid=(n_tiles,),
        in_specs=in_specs,
        out_specs=out_specs,
    )

    out = pl.pallas_call(
        _ae_kernel,
        out_shape=jax.ShapeDtypeStruct((Bp, Dp), od),
        grid_spec=grid_spec,
        compiler_params=pltpu.CompilerParams(
            dimension_semantics=("parallel",),    # shards grid across v7x TCs
            vmem_limit_bytes=vmem_limit),
        cost_estimate=cost,
    )(xp, *flat_params)

    if Bp != B or Dp != D:
        out = out[:B, :D]
    return out


def init_params(key, input_dim):
    """Deterministic synthetic parameters with the shapes implied by AE.__init__."""
    dims = [(input_dim, 128), (128, 64), (64, 16),      # encoder
            (16, 64), (64, 128), (128, input_dim)]      # decoder
    params = {}
    keys = jax.random.split(key, 2 * len(dims))
    for n, (fan_in, fan_out) in enumerate(dims):
        bound = 1.0 / jnp.sqrt(jnp.float32(fan_in))      # torch default uniform bound
        w = jax.random.uniform(keys[2 * n], (fan_in, fan_out),
                               minval=-bound, maxval=bound, dtype=jnp.float32)
        b = jax.random.uniform(keys[2 * n + 1], (1, fan_out),
                               minval=-bound, maxval=bound, dtype=jnp.float32)
        params[f"w{n + 1}"] = w
        params[f"b{n + 1}"] = b
    return params


def ae_forward_ref(x, p, *, compute_dtype=jnp.float32):
    """Pure-JAX reference; compute_dtype mirrors the kernel's MXU input dtype."""
    cd = compute_dtype

    def dense(h, w, b):
        return jnp.dot(h.astype(cd), w.astype(cd),
                       preferred_element_type=jnp.float32) + b

    h = jnp.maximum(dense(x, p["w1"], p["b1"]), 0.0)
    h = jnp.maximum(dense(h, p["w2"], p["b2"]), 0.0)
    z = 1.0 / (1.0 + jnp.exp(-dense(h, p["w3"], p["b3"])))
    h = jnp.maximum(dense(z, p["w4"], p["b4"]), 0.0)
    h = jnp.maximum(dense(h, p["w5"], p["b5"]), 0.0)
    return dense(h, p["w6"], p["b6"])


if __name__ == "__main__":
    INPUT_DIM = 200   # deliberately NOT a multiple of 128 -> exercises lane padding
    BATCH = 20        # deliberately NOT a multiple of 8   -> exercises batch padding

    key = jax.random.PRNGKey(0)
    k_x, k_p = jax.random.split(key)
    x = jax.random.normal(k_x, (BATCH, INPUT_DIM), dtype=jnp.float32)
    params = init_params(k_p, INPUT_DIM)

    # Default fast path: bf16 MXU inputs, f32 accumulation / elementwise, f32 out.
    out_bf16 = jax.block_until_ready(
        jax.jit(functools.partial(ae_forward, tm=512))(x, params))
    ref_bf16 = ae_forward_ref(x, params, compute_dtype=jnp.bfloat16)
    assert out_bf16.shape == (BATCH, INPUT_DIM)
    assert jnp.allclose(out_bf16, ref_bf16, atol=2e-3, rtol=2e-3), \
        "bf16 kernel mismatch vs bf16 JAX reference"

    # Full-f32 path: exact semantics of the PyTorch module.
    out_f32 = jax.block_until_ready(
        jax.jit(functools.partial(ae_forward, tm=512,
                                  compute_dtype=jnp.float32))(x, params))
    ref_f32 = ae_forward_ref(x, params, compute_dtype=jnp.float32)
    assert out_f32.shape == (BATCH, INPUT_DIM)
    assert jnp.allclose(out_f32, ref_f32, atol=1e-4, rtol=1e-4), \
        "f32 kernel mismatch vs f32 JAX reference"

    print("KERNEL_OK")
</pallas_src>

<mosaic_0001>
module attributes {stable_mosaic.version = 11 : i64} {
  func.func @_ae_kernel(%arg0: i32, %arg1: memref<24x256xf32, #tpu.memory_space<vmem>>, %arg2: memref<256x128xbf16, #tpu.memory_space<vmem>>, %arg3: memref<1x128xf32, #tpu.memory_space<vmem>>, %arg4: memref<128x64xbf16, #tpu.memory_space<vmem>>, %arg5: memref<1x64xf32, #tpu.memory_space<vmem>>, %arg6: memref<64x16xbf16, #tpu.memory_space<vmem>>, %arg7: memref<1x16xf32, #tpu.memory_space<vmem>>, %arg8: memref<16x64xbf16, #tpu.memory_space<vmem>>, %arg9: memref<1x64xf32, #tpu.memory_space<vmem>>, %arg10: memref<64x128xbf16, #tpu.memory_space<vmem>>, %arg11: memref<1x128xf32, #tpu.memory_space<vmem>>, %arg12: memref<128x256xbf16, #tpu.memory_space<vmem>>, %arg13: memref<1x256xf32, #tpu.memory_space<vmem>>, %arg14: memref<24x256xf32, #tpu.memory_space<vmem>>) attributes {dimension_semantics = [#tpu.dimension_semantics<parallel>], iteration_bounds = array<i64: 1>, scalar_prefetch = 0 : i64, scratch_operands = 0 : i64, tpu.core_type = #tpu.core_type<tc>, window_params = [{transform_indices = @transform_0, window_bounds = array<i64: 24, 256>}, {pipeline_mode = #tpu.pipeline_mode<synchronous>, transform_indices = @transform_1, window_bounds = array<i64: 256, 128>}, {pipeline_mode = #tpu.pipeline_mode<synchronous>, transform_indices = @transform_2, window_bounds = array<i64: 1, 128>}, {pipeline_mode = #tpu.pipeline_mode<synchronous>, transform_indices = @transform_3, window_bounds = array<i64: 128, 64>}, {pipeline_mode = #tpu.pipeline_mode<synchronous>, transform_indices = @transform_4, window_bounds = array<i64: 1, 64>}, {pipeline_mode = #tpu.pipeline_mode<synchronous>, transform_indices = @transform_5, window_bounds = array<i64: 64, 16>}, {pipeline_mode = #tpu.pipeline_mode<synchronous>, transform_indices = @transform_6, window_bounds = array<i64: 1, 16>}, {pipeline_mode = #tpu.pipeline_mode<synchronous>, transform_indices = @transform_7, window_bounds = array<i64: 16, 64>}, {pipeline_mode = #tpu.pipeline_mode<synchronous>, transform_indices = @transform_8, window_bounds = array<i64: 1, 64>}, {pipeline_mode = #tpu.pipeline_mode<synchronous>, transform_indices = @transform_9, window_bounds = array<i64: 64, 128>}, {pipeline_mode = #tpu.pipeline_mode<synchronous>, transform_indices = @transform_10, window_bounds = array<i64: 1, 128>}, {pipeline_mode = #tpu.pipeline_mode<synchronous>, transform_indices = @transform_11, window_bounds = array<i64: 128, 256>}, {pipeline_mode = #tpu.pipeline_mode<synchronous>, transform_indices = @transform_12, window_bounds = array<i64: 1, 256>}, {transform_indices = @transform_13, window_bounds = array<i64: 24, 256>}]} {
    %c0 = arith.constant 0 : index
    %c0_0 = arith.constant 0 : index
    %0 = vector.load %arg1[%c0, %c0_0] : memref<24x256xf32, #tpu.memory_space<vmem>>, vector<24x256xf32>
    %1 = arith.truncf %0 : vector<24x256xf32> to vector<24x256xbf16>
    %c0_1 = arith.constant 0 : index
    %c0_2 = arith.constant 0 : index
    %2 = vector.load %arg2[%c0_1, %c0_2] : memref<256x128xbf16, #tpu.memory_space<vmem>>, vector<256x128xbf16>
    %cst = arith.constant dense<0.000000e+00> : vector<24x128xf32>
    %3 = tpu.matmul %1, %2, %cst {dimension_numbers = #tpu.dot_dimension_numbers<[1], [0], [0], [1], [0, 0, 1, 1], [], []>} : vector<24x256xbf16>, vector<256x128xbf16>, vector<24x128xf32> -> vector<24x128xf32>
    %c0_3 = arith.constant 0 : index
    %c0_4 = arith.constant 0 : index
    %4 = vector.load %arg3[%c0_3, %c0_4] : memref<1x128xf32, #tpu.memory_space<vmem>>, vector<1x128xf32>
    %5 = vector.broadcast %4 : vector<1x128xf32> to vector<24x128xf32>
    %6 = arith.addf %3, %5 : vector<24x128xf32>
    %cst_5 = arith.constant 0.000000e+00 : f32
    %7 = vector.broadcast %cst_5 : f32 to vector<24x128xf32>
    %8 = arith.maximumf %6, %7 : vector<24x128xf32>
    %9 = arith.truncf %8 : vector<24x128xf32> to vector<24x128xbf16>
    %c0_6 = arith.constant 0 : index
    %c0_7 = arith.constant 0 : index
    %10 = vector.load %arg4[%c0_6, %c0_7] : memref<128x64xbf16, #tpu.memory_space<vmem>>, vector<128x64xbf16>
    %cst_8 = arith.constant dense<0.000000e+00> : vector<24x64xf32>
    %11 = tpu.matmul %9, %10, %cst_8 {dimension_numbers = #tpu.dot_dimension_numbers<[1], [0], [0], [1], [0, 0, 1, 1], [], []>} : vector<24x128xbf16>, vector<128x64xbf16>, vector<24x64xf32> -> vector<24x64xf32>
    %c0_9 = arith.constant 0 : index
    %c0_10 = arith.constant 0 : index
    %12 = vector.load %arg5[%c0_9, %c0_10] : memref<1x64xf32, #tpu.memory_space<vmem>>, vector<1x64xf32>
    %13 = vector.broadcast %12 : vector<1x64xf32> to vector<24x64xf32>
    %14 = arith.addf %11, %13 : vector<24x64xf32>
    %cst_11 = arith.constant 0.000000e+00 : f32
    %15 = vector.broadcast %cst_11 : f32 to vector<24x64xf32>
    %16 = arith.maximumf %14, %15 : vector<24x64xf32>
    %17 = arith.truncf %16 : vector<24x64xf32> to vector<24x64xbf16>
    %c0_12 = arith.constant 0 : index
    %c0_13 = arith.constant 0 : index
    %18 = vector.load %arg6[%c0_12, %c0_13] : memref<64x16xbf16, #tpu.memory_space<vmem>>, vector<64x16xbf16>
    %cst_14 = arith.constant dense<0.000000e+00> : vector<24x16xf32>
    %19 = tpu.matmul %17, %18, %cst_14 {dimension_numbers = #tpu.dot_dimension_numbers<[1], [0], [0], [1], [0, 0, 1, 1], [], []>} : vector<24x64xbf16>, vector<64x16xbf16>, vector<24x16xf32> -> vector<24x16xf32>
    %c0_15 = arith.constant 0 : index
    %c0_16 = arith.constant 0 : index
    %20 = vector.load %arg7[%c0_15, %c0_16] : memref<1x16xf32, #tpu.memory_space<vmem>>, vector<1x16xf32>
    %21 = vector.broadcast %20 : vector<1x16xf32> to vector<24x16xf32>
    %22 = arith.addf %19, %21 : vector<24x16xf32>
    %cst_17 = arith.constant 0.000000e+00 : f32
    %23 = vector.broadcast %cst_17 : f32 to vector<24x16xf32>
    %24 = arith.subf %23, %22 : vector<24x16xf32>
    %25 = math.exp %24 : vector<24x16xf32>
    %cst_18 = arith.constant 1.000000e+00 : f32
    %26 = vector.broadcast %cst_18 : f32 to vector<24x16xf32>
    %27 = arith.addf %26, %25 : vector<24x16xf32>
    %cst_19 = arith.constant 1.000000e+00 : f32
    %28 = vector.broadcast %cst_19 : f32 to vector<24x16xf32>
    %29 = arith.divf %28, %27 : vector<24x16xf32>
    %30 = arith.truncf %29 : vector<24x16xf32> to vector<24x16xbf16>
    %c0_20 = arith.constant 0 : index
    %c0_21 = arith.constant 0 : index
    %31 = vector.load %arg8[%c0_20, %c0_21] : memref<16x64xbf16, #tpu.memory_space<vmem>>, vector<16x64xbf16>
    %cst_22 = arith.constant dense<0.000000e+00> : vector<24x64xf32>
    %32 = tpu.matmul %30, %31, %cst_22 {dimension_numbers = #tpu.dot_dimension_numbers<[1], [0], [0], [1], [0, 0, 1, 1], [], []>} : vector<24x16xbf16>, vector<16x64xbf16>, vector<24x64xf32> -> vector<24x64xf32>
    %c0_23 = arith.constant 0 : index
    %c0_24 = arith.constant 0 : index
    %33 = vector.load %arg9[%c0_23, %c0_24] : memref<1x64xf32, #tpu.memory_space<vmem>>, vector<1x64xf32>
    %34 = vector.broadcast %33 : vector<1x64xf32> to vector<24x64xf32>
    %35 = arith.addf %32, %34 : vector<24x64xf32>
    %cst_25 = arith.constant 0.000000e+00 : f32
    %36 = vector.broadcast %cst_25 : f32 to vector<24x64xf32>
    %37 = arith.maximumf %35, %36 : vector<24x64xf32>
    %38 = arith.truncf %37 : vector<24x64xf32> to vector<24x64xbf16>
    %c0_26 = arith.constant 0 : index
    %c0_27 = arith.constant 0 : index
    %39 = vector.load %arg10[%c0_26, %c0_27] : memref<64x128xbf16, #tpu.memory_space<vmem>>, vector<64x128xbf16>
    %cst_28 = arith.constant dense<0.000000e+00> : vector<24x128xf32>
    %40 = tpu.matmul %38, %39, %cst_28 {dimension_numbers = #tpu.dot_dimension_numbers<[1], [0], [0], [1], [0, 0, 1, 1], [], []>} : vector<24x64xbf16>, vector<64x128xbf16>, vector<24x128xf32> -> vector<24x128xf32>
    %c0_29 = arith.constant 0 : index
    %c0_30 = arith.constant 0 : index
    %41 = vector.load %arg11[%c0_29, %c0_30] : memref<1x128xf32, #tpu.memory_space<vmem>>, vector<1x128xf32>
    %42 = vector.broadcast %41 : vector<1x128xf32> to vector<24x128xf32>
    %43 = arith.addf %40, %42 : vector<24x128xf32>
    %cst_31 = arith.constant 0.000000e+00 : f32
    %44 = vector.broadcast %cst_31 : f32 to vector<24x128xf32>
    %45 = arith.maximumf %43, %44 : vector<24x128xf32>
    %46 = arith.truncf %45 : vector<24x128xf32> to vector<24x128xbf16>
    %c0_32 = arith.constant 0 : index
    %c0_33 = arith.constant 0 : index
    %47 = vector.load %arg12[%c0_32, %c0_33] : memref<128x256xbf16, #tpu.memory_space<vmem>>, vector<128x256xbf16>
    %cst_34 = arith.constant dense<0.000000e+00> : vector<24x256xf32>
    %48 = tpu.matmul %46, %47, %cst_34 {dimension_numbers = #tpu.dot_dimension_numbers<[1], [0], [0], [1], [0, 0, 1, 1], [], []>} : vector<24x128xbf16>, vector<128x256xbf16>, vector<24x256xf32> -> vector<24x256xf32>
    %c0_35 = arith.constant 0 : index
    %c0_36 = arith.constant 0 : index
    %49 = vector.load %arg13[%c0_35, %c0_36] : memref<1x256xf32, #tpu.memory_space<vmem>>, vector<1x256xf32>
    %50 = vector.broadcast %49 : vector<1x256xf32> to vector<24x256xf32>
    %51 = arith.addf %48, %50 : vector<24x256xf32>
    %c0_37 = arith.constant 0 : index
    %c0_38 = arith.constant 0 : index
    %52 = vector.load %arg14[%c0_37, %c0_38] : memref<24x256xf32, #tpu.memory_space<vmem>>, vector<24x256xf32>
    tpu.vector_store %arg14[%c0_37, %c0_38], %51 {strides = array<i32>} : memref<24x256xf32, #tpu.memory_space<vmem>>, vector<24x256xf32>,
    return
  }
  func.func @transform_0(%arg0: i32) -> (i32, i32) {
    %c0_i32 = arith.constant 0 : i32
    %c0_i32_0 = arith.constant 0 : i32
    return %arg0, %c0_i32 : i32, i32
  }
  func.func @transform_1(%arg0: i32) -> (i32, i32) {
    %c0_i32 = arith.constant 0 : i32
    %c0_i32_0 = arith.constant 0 : i32
    %c0_i32_1 = arith.constant 0 : i32
    return %c0_i32, %c0_i32_0 : i32, i32
  }
  func.func @transform_2(%arg0: i32) -> (i32, i32) {
    %c0_i32 = arith.constant 0 : i32
    %c0_i32_0 = arith.constant 0 : i32
    %c0_i32_1 = arith.constant 0 : i32
    return %c0_i32, %c0_i32_0 : i32, i32
  }
  func.func @transform_3(%arg0: i32) -> (i32, i32) {
    %c0_i32 = arith.constant 0 : i32
    %c0_i32_0 = arith.constant 0 : i32
    %c0_i32_1 = arith.constant 0 : i32
    return %c0_i32, %c0_i32_0 : i32, i32
  }
  func.func @transform_4(%arg0: i32) -> (i32, i32) {
    %c0_i32 = arith.constant 0 : i32
    %c0_i32_0 = arith.constant 0 : i32
    %c0_i32_1 = arith.constant 0 : i32
    return %c0_i32, %c0_i32_0 : i32, i32
  }
  func.func @transform_5(%arg0: i32) -> (i32, i32) {
    %c0_i32 = arith.constant 0 : i32
    %c0_i32_0 = arith.constant 0 : i32
    %c0_i32_1 = arith.constant 0 : i32
    return %c0_i32, %c0_i32_0 : i32, i32
  }
  func.func @transform_6(%arg0: i32) -> (i32, i32) {
    %c0_i32 = arith.constant 0 : i32
    %c0_i32_0 = arith.constant 0 : i32
    %c0_i32_1 = arith.constant 0 : i32
    return %c0_i32, %c0_i32_0 : i32, i32
  }
  func.func @transform_7(%arg0: i32) -> (i32, i32) {
    %c0_i32 = arith.constant 0 : i32
    %c0_i32_0 = arith.constant 0 : i32
    %c0_i32_1 = arith.constant 0 : i32
    return %c0_i32, %c0_i32_0 : i32, i32
  }
  func.func @transform_8(%arg0: i32) -> (i32, i32) {
    %c0_i32 = arith.constant 0 : i32
    %c0_i32_0 = arith.constant 0 : i32
    %c0_i32_1 = arith.constant 0 : i32
    return %c0_i32, %c0_i32_0 : i32, i32
  }
  func.func @transform_9(%arg0: i32) -> (i32, i32) {
    %c0_i32 = arith.constant 0 : i32
    %c0_i32_0 = arith.constant 0 : i32
    %c0_i32_1 = arith.constant 0 : i32
    return %c0_i32, %c0_i32_0 : i32, i32
  }
  func.func @transform_10(%arg0: i32) -> (i32, i32) {
    %c0_i32 = arith.constant 0 : i32
    %c0_i32_0 = arith.constant 0 : i32
    %c0_i32_1 = arith.constant 0 : i32
    return %c0_i32, %c0_i32_0 : i32, i32
  }
  func.func @transform_11(%arg0: i32) -> (i32, i32) {
    %c0_i32 = arith.constant 0 : i32
    %c0_i32_0 = arith.constant 0 : i32
    %c0_i32_1 = arith.constant 0 : i32
    return %c0_i32, %c0_i32_0 : i32, i32
  }
  func.func @transform_12(%arg0: i32) -> (i32, i32) {
    %c0_i32 = arith.constant 0 : i32
    %c0_i32_0 = arith.constant 0 : i32
    %c0_i32_1 = arith.constant 0 : i32
    return %c0_i32, %c0_i32_0 : i32, i32
  }
  func.func @transform_13(%arg0: i32) -> (i32, i32) {
    %c0_i32 = arith.constant 0 : i32
    %c0_i32_0 = arith.constant 0 : i32
    return %arg0, %c0_i32 : i32, i32
  }
}

</mosaic_0001>

<llo_original>
// kernel: ae_forward.1
$region0: #{ae_forward.1}
  #allocation0 [shape = 'u32[]', space=smem, size = 0x4, offset = 0x4, fixed_abs, tag = 'smem constant byte address 0x4 - core index']
  #allocation1 [shape = 'u32[144,128]{1,0:T(1,128)}', space=vmem, size = 0x12000, scoped, tag = 'internal scratch']
  %s0 = inlined_call_operand.vmem [shape: f32[24,256], index: 0, kind: input, shape index: {}]
  %s1 = inlined_call_operand.vmem [shape: bf16[256,128], index: 1, kind: input, shape index: {}]
  %s2 = inlined_call_operand.vmem [shape: f32[1,128], index: 2, kind: input, shape index: {}]
  %s3 = inlined_call_operand.vmem [shape: bf16[128,64], index: 3, kind: input, shape index: {}]
  %s4 = inlined_call_operand.vmem [shape: f32[1,64], index: 4, kind: input, shape index: {}]
  %s5 = inlined_call_operand.vmem [shape: bf16[64,16], index: 5, kind: input, shape index: {}]
  %s6 = inlined_call_operand.vmem [shape: f32[1,16], index: 6, kind: input, shape index: {}]
  %s7 = inlined_call_operand.vmem [shape: bf16[16,64], index: 7, kind: input, shape index: {}]
  %s8 = inlined_call_operand.vmem [shape: f32[1,64], index: 8, kind: input, shape index: {}]
  %s9 = inlined_call_operand.vmem [shape: bf16[64,128], index: 9, kind: input, shape index: {}]
  %s10 = inlined_call_operand.vmem [shape: f32[1,128], index: 10, kind: input, shape index: {}]
  %s11 = inlined_call_operand.vmem [shape: bf16[128,256], index: 11, kind: input, shape index: {}]
  %s12 = inlined_call_operand.vmem [shape: f32[1,256], index: 12, kind: input, shape index: {}]
  %s13 = inlined_call_operand.hbm [shape: f32[24,256], index: 13, kind: output, shape index: {}]
  %s14 = sld [smem:[#allocation0]]
  $region62: #{ae_forward.1} parent=0
    _
  %s16 = ssub.s32 1, %s14
  %s17 = scalar_select 0, %s16, %s14
  $region1: #{ae_forward.1} parent=0
    #allocation2 [shape = 'u8[24576]{0}', space=vmem, size = 0x6000, scoped, tag = 'output window, operand 0, single buffered']
    #allocation3 [shape = 's32[1]{0}', space=sflag, size = 0x4, scoped, tag = 'scoped memory for ae_forward.1']
    %18 = vsyncpa [#allocation3], 0
    // Predicated region
    $region2: #{ae_forward.1} parent=1 // pred_check
      _
    $region3: #{ae_forward.1} parent=1 // pred_check_branch
      %20 = sbr.rel (0) target = $region5
    $region4: #{ae_forward.1} parent=1 // pred_region
      _
    $region5: #{ae_forward.1} parent=1 // pred_fallthru
      _
    // Predicated region
    $region6: #{ae_forward.1} parent=1 // pred_check
      _
    $region7: #{ae_forward.1} parent=1 // pred_check_branch
      %22 = sbr.rel (0) target = $region9
    $region8: #{ae_forward.1} parent=1 // pred_region
      _
    $region9: #{ae_forward.1} parent=1 // pred_fallthru
      _
    // Predicated region
    $region10: #{ae_forward.1} parent=1 // pred_check
      _
    $region11: #{ae_forward.1} parent=1 // pred_check_branch
      %24 = sbr.rel (0) target = $region13
    $region12: #{ae_forward.1} parent=1 // pred_region
      _
    $region13: #{ae_forward.1} parent=1 // pred_fallthru
      _
    // Predicated region
    $region14: #{ae_forward.1} parent=1 // pred_check
      _
    $region15: #{ae_forward.1} parent=1 // pred_check_branch
      %26 = sbr.rel (0) target = $region17
    $region16: #{ae_forward.1} parent=1 // pred_region
      _
    $region17: #{ae_forward.1} parent=1 // pred_fallthru
      _
    // Predicated region
    $region18: #{ae_forward.1} parent=1 // pred_check
      _
    $region19: #{ae_forward.1} parent=1 // pred_check_branch
      %28 = sbr.rel (0) target = $region21
    $region20: #{ae_forward.1} parent=1 // pred_region
      _
    $region21: #{ae_forward.1} parent=1 // pred_fallthru
      _
    // Predicated region
    $region22: #{ae_forward.1} parent=1 // pred_check
      _
    $region23: #{ae_forward.1} parent=1 // pred_check_branch
      %30 = sbr.rel (0) target = $region25
    $region24: #{ae_forward.1} parent=1 // pred_region
      _
    $region25: #{ae_forward.1} parent=1 // pred_fallthru
      _
    // Predicated region
    $region26: #{ae_forward.1} parent=1 // pred_check
      _
    $region27: #{ae_forward.1} parent=1 // pred_check_branch
      %32 = sbr.rel (0) target = $region29
    $region28: #{ae_forward.1} parent=1 // pred_region
      _
    $region29: #{ae_forward.1} parent=1 // pred_fallthru
      _
    // Predicated region
    $region30: #{ae_forward.1} parent=1 // pred_check
      _
    $region31: #{ae_forward.1} parent=1 // pred_check_branch
      %34 = sbr.rel (0) target = $region33
    $region32: #{ae_forward.1} parent=1 // pred_region
      _
    $region33: #{ae_forward.1} parent=1 // pred_fallthru
      _
    // Predicated region
    $region34: #{ae_forward.1} parent=1 // pred_check
      _
    $region35: #{ae_forward.1} parent=1 // pred_check_branch
      %36 = sbr.rel (0) target = $region37
    $region36: #{ae_forward.1} parent=1 // pred_region
      _
    $region37: #{ae_forward.1} parent=1 // pred_fallthru
      _
    // Predicated region
    $region38: #{ae_forward.1} parent=1 // pred_check
      _
    $region39: #{ae_forward.1} parent=1 // pred_check_branch
      %38 = sbr.rel (0) target = $region41
    $region40: #{ae_forward.1} parent=1 // pred_region
      _
    $region41: #{ae_forward.1} parent=1 // pred_fallthru
      _
    // Predicated region
    $region42: #{ae_forward.1} parent=1 // pred_check
      _
    $region43: #{ae_forward.1} parent=1 // pred_check_branch
      %40 = sbr.rel (0) target = $region45
    $region44: #{ae_forward.1} parent=1 // pred_region
      _
    $region45: #{ae_forward.1} parent=1 // pred_fallthru
      _
    // Predicated region
    $region46: #{ae_forward.1} parent=1 // pred_check
      _
    $region47: #{ae_forward.1} parent=1 // pred_check_branch
      %42 = sbr.rel (0) target = $region49
    $region48: #{ae_forward.1} parent=1 // pred_region
      _
    $region49: #{ae_forward.1} parent=1 // pred_fallthru
      _
    // Predicated region
    $region50: #{ae_forward.1} parent=1 // pred_check
      _
    $region51: #{ae_forward.1} parent=1 // pred_check_branch
      %44 = sbr.rel (0) target = $region53
    $region52: #{ae_forward.1} parent=1 // pred_region
      _
    $region53: #{ae_forward.1} parent=1 // pred_fallthru
      _
    %v46 = vld [vmem:[%s0] sm:$0xff]
    %v47 = vld [vmem:[%s0 + $0x8] sm:$0xff]
    %v48 = vld [vmem:[%s0 + $0x10] sm:$0xff]
    %v49 = vld [vmem:[%s0 + $0x18] sm:$0xff]
    %v50 = vld [vmem:[%s0 + $0x20] sm:$0xff]
    %v51 = vld [vmem:[%s0 + $0x28] sm:$0xff]
    %v52 = vpack.c.bf16 %v48, %v46
    %v53 = vpack.c.bf16 %v49, %v47
    %v54 = vpack.c.bf16 %v50, %v50
    %v55 = vpack.c.bf16 %v51, %v51
    %v56 = vld [vmem:[%s1] sm:$0xf]
    %v57 = vld [vmem:[%s1 + $0x4] sm:$0xf]
    %v58 = vld [vmem:[%s1 + $0x8] sm:$0xf]
    %v59 = vld [vmem:[%s1 + $0xc] sm:$0xf]
    %v60 = vld [vmem:[%s1 + $0x10] sm:$0xf]
    %v61 = vld [vmem:[%s1 + $0x14] sm:$0xf]
    %v62 = vld [vmem:[%s1 + $0x18] sm:$0xf]
    %v63 = vld [vmem:[%s1 + $0x1c] sm:$0xf]
    %v64 = vld [vmem:[%s1 + $0x20] sm:$0xf]
    %v65 = vld [vmem:[%s1 + $0x24] sm:$0xf]
    %v66 = vld [vmem:[%s1 + $0x28] sm:$0xf]
    %v67 = vld [vmem:[%s1 + $0x2c] sm:$0xf]
    %v68 = vld [vmem:[%s1 + $0x30] sm:$0xf]
    %v69 = vld [vmem:[%s1 + $0x34] sm:$0xf]
    %v70 = vld [vmem:[%s1 + $0x38] sm:$0xf]
    %v71 = vld [vmem:[%s1 + $0x3c] sm:$0xf]
    %v72 = vld [vmem:[%s1 + $0x40] sm:$0xf]
    %v73 = vld [vmem:[%s1 + $0x44] sm:$0xf]
    %v74 = vld [vmem:[%s1 + $0x48] sm:$0xf]
    %v75 = vld [vmem:[%s1 + $0x4c] sm:$0xf]
    %v76 = vld [vmem:[%s1 + $0x50] sm:$0xf]
    %v77 = vld [vmem:[%s1 + $0x54] sm:$0xf]
    %v78 = vld [vmem:[%s1 + $0x58] sm:$0xf]
    %v79 = vld [vmem:[%s1 + $0x5c] sm:$0xf]
    %v80 = vld [vmem:[%s1 + $0x60] sm:$0xf]
    %v81 = vld [vmem:[%s1 + $0x64] sm:$0xf]
    %v82 = vld [vmem:[%s1 + $0x68] sm:$0xf]
    %v83 = vld [vmem:[%s1 + $0x6c] sm:$0xf]
    %v84 = vld [vmem:[%s1 + $0x70] sm:$0xf]
    %v85 = vld [vmem:[%s1 + $0x74] sm:$0xf]
    %v86 = vld [vmem:[%s1 + $0x78] sm:$0xf]
    %v87 = vld [vmem:[%s1 + $0x7c] sm:$0xf]
    %v88 = vld [vmem:[%s2] sm:$0x1]
    %v90 = vlaneseq
    %v91 = vshrl.u32 %v90, 7
    %v92 = vsub.s32 0, %v91
    %v93 = vrot.slane %v88, %v92
    %v127 = vunpack.c.l.b16 %v56
    %v128 = vunpack.c.l.b16 %v57
    %v129 = vunpack.c.l.b16 %v58
    %v130 = vunpack.c.l.b16 %v59
    %v131 = vunpack.c.l.b16 %v60
    %v132 = vunpack.c.l.b16 %v61
    %v133 = vunpack.c.l.b16 %v62
    %v134 = vunpack.c.l.b16 %v63
    %v135 = vunpack.c.l.b16 %v64
    %v136 = vunpack.c.l.b16 %v65
    %v137 = vunpack.c.l.b16 %v66
    %v138 = vunpack.c.l.b16 %v67
    %v139 = vunpack.c.l.b16 %v68
    %v140 = vunpack.c.l.b16 %v69
    %v141 = vunpack.c.l.b16 %v70
    %v142 = vunpack.c.l.b16 %v71
    %v143 = vunpack.c.l.b16 %v72
    %v144 = vunpack.c.l.b16 %v73
    %v145 = vunpack.c.l.b16 %v74
    %v146 = vunpack.c.l.b16 %v75
    %v147 = vunpack.c.l.b16 %v76
    %v148 = vunpack.c.l.b16 %v77
    %v149 = vunpack.c.l.b16 %v78
    %v150 = vunpack.c.l.b16 %v79
    %v151 = vunpack.c.l.b16 %v80
    %v152 = vunpack.c.l.b16 %v81
    %v153 = vunpack.c.l.b16 %v82
    %v154 = vunpack.c.l.b16 %v83
    %v155 = vunpack.c.l.b16 %v84
    %v156 = vunpack.c.l.b16 %v85
    %v157 = vunpack.c.l.b16 %v86
    %v158 = vunpack.c.l.b16 %v87
    %v159 = vpack.c.b16 %v128, %v127
    %v160 = vpack.c.b16 %v130, %v129
    %v161 = vpack.c.b16 %v132, %v131
    %v162 = vpack.c.b16 %v134, %v133
    %v163 = vpack.c.b16 %v136, %v135
    %v164 = vpack.c.b16 %v138, %v137
    %v165 = vpack.c.b16 %v140, %v139
    %v166 = vpack.c.b16 %v142, %v141
    %v167 = vpack.c.b16 %v144, %v143
    %v168 = vpack.c.b16 %v146, %v145
    %v169 = vpack.c.b16 %v148, %v147
    %v170 = vpack.c.b16 %v150, %v149
    %v171 = vpack.c.b16 %v152, %v151
    %v172 = vpack.c.b16 %v154, %v153
    %v173 = vpack.c.b16 %v156, %v155
    %v174 = vpack.c.b16 %v158, %v157
    %191 = vmatprep.subr.bf16.mxu0 0
    %192 = vmatpush1.bf16.msra.mxu0 %v159
    %193 = vmatprep.subr.bf16.mxu0 0
    %194 = vmatpush1.bf16.msra.mxu0 %v160
    %195 = vmatprep.subr.bf16.mxu0 0
    %196 = vmatpush1.bf16.msra.mxu0 %v161
    %197 = vmatprep.subr.bf16.mxu0 0
    %198 = vmatpush1.bf16.msra.mxu0 %v162
    %199 = vmatprep.subr.bf16.mxu0 0
    %200 = vmatpush1.bf16.msra.mxu0 %v163
    %201 = vmatprep.subr.bf16.mxu0 0
    %202 = vmatpush1.bf16.msra.mxu0 %v164
    %203 = vmatprep.subr.bf16.mxu0 0
    %204 = vmatpush1.bf16.msra.mxu0 %v165
    %205 = vmatprep.subr.bf16.mxu0 0
    %206 = vmatpush1.bf16.msra.mxu0 %v166
    %207 = vmatprep.subr.bf16.mxu0 0
    %208 = vmatpush1.bf16.msra.mxu0 %v167
    %209 = vmatprep.subr.bf16.mxu0 0
    %210 = vmatpush1.bf16.msra.mxu0 %v168
    %211 = vmatprep.subr.bf16.mxu0 0
    %212 = vmatpush1.bf16.msra.mxu0 %v169
    %213 = vmatprep.subr.bf16.mxu0 0
    %214 = vmatpush1.bf16.msra.mxu0 %v170
    %215 = vmatprep.subr.bf16.mxu0 0
    %216 = vmatpush1.bf16.msra.mxu0 %v171
    %217 = vmatprep.subr.bf16.mxu0 0
    %218 = vmatpush1.bf16.msra.mxu0 %v172
    %219 = vmatprep.subr.bf16.mxu0 0
    %220 = vmatpush1.bf16.msra.mxu0 %v173
    %221 = vmatprep.subr.bf16.mxu0 0
    %222 = vmatpush1.bf16.msra.mxu0 %v174
    %223 = vmatprep.mubr.bf16.mxu0 %v53
    %224 = vmatmul.mubr.bf16.gmra.mrb[0].mxu0 %v52
    %v225 = vpop.f32.mrb[0].mxu0
    %v226 = vadd.f32 %v93, %v225
    %v227 = vpop.f32.mrb[0].mxu0
    %v228 = vpop.f32.mrb[0].mxu0
    %v229 = vadd.f32 %v93, %v228
    %v230 = vpop.f32.mrb[0].mxu0
    %231 = vmatprep.mubr.bf16.mxu0 %v55
    %232 = vmatmul.mubr.bf16.gmra.mrb[0].mxu0 %v54
    %v233 = vpop.f32.mrb[0].mxu0
    %v234 = vadd.f32 %v93, %v233
    %v235 = vpop.f32.mrb[0].mxu0
    %v236 = vpop.f32.mrb[0].mxu0
    %v237 = vpop.f32.mrb[0].mxu0
    %238 = vdwg.mxu0
    %v239 = vmax.f32 %v226, 0.0
    %v240 = vmax.f32 %v229, 0.0
    %v241 = vmax.f32 %v234, 0.0
    %v242 = vpack.c.bf16 %v240, %v239
    %v243 = vpack.c.bf16 %v241, %v241
    %v244 = vld [vmem:[%s3] sm:$0xf]
    %v245 = vld [vmem:[%s3 + $0x4] sm:$0xf]
    %v246 = vld [vmem:[%s3 + $0x8] sm:$0xf]
    %v247 = vld [vmem:[%s3 + $0xc] sm:$0xf]
    %v248 = vld [vmem:[%s3 + $0x10] sm:$0xf]
    %v249 = vld [vmem:[%s3 + $0x14] sm:$0xf]
    %v250 = vld [vmem:[%s3 + $0x18] sm:$0xf]
    %v251 = vld [vmem:[%s3 + $0x1c] sm:$0xf]
    %v252 = vld [vmem:[%s3 + $0x20] sm:$0xf]
    %v253 = vld [vmem:[%s3 + $0x24] sm:$0xf]
    %v254 = vld [vmem:[%s3 + $0x28] sm:$0xf]
    %v255 = vld [vmem:[%s3 + $0x2c] sm:$0xf]
    %v256 = vld [vmem:[%s3 + $0x30] sm:$0xf]
    %v257 = vld [vmem:[%s3 + $0x34] sm:$0xf]
    %v258 = vld [vmem:[%s3 + $0x38] sm:$0xf]
    %v259 = vld [vmem:[%s3 + $0x3c] sm:$0xf]
    %v260 = vld [vmem:[%s4] sm:$0x1]
    %v262 = vlaneseq
    %v263 = vshrl.u32 %v262, 7
    %v264 = vsub.s32 0, %v263
    %v265 = vrot.slane %v260, %v264
    %v283 = vunpack.c.l.b16 %v244
    %v284 = vunpack.c.l.b16 %v245
    %v285 = vunpack.c.l.b16 %v246
    %v286 = vunpack.c.l.b16 %v247
    %v287 = vunpack.c.l.b16 %v248
    %v288 = vunpack.c.l.b16 %v249
    %v289 = vunpack.c.l.b16 %v250
    %v290 = vunpack.c.l.b16 %v251
    %v291 = vunpack.c.l.b16 %v252
    %v292 = vunpack.c.l.b16 %v253
    %v293 = vunpack.c.l.b16 %v254
    %v294 = vunpack.c.l.b16 %v255
    %v295 = vunpack.c.l.b16 %v256
    %v296 = vunpack.c.l.b16 %v257
    %v297 = vunpack.c.l.b16 %v258
    %v298 = vunpack.c.l.b16 %v259
    %v299 = vpack.c.b16 %v284, %v283
    %v300 = vpack.c.b16 %v286, %v285
    %v301 = vpack.c.b16 %v288, %v287
    %v302 = vpack.c.b16 %v290, %v289
    %v303 = vpack.c.b16 %v292, %v291
    %v304 = vpack.c.b16 %v294, %v293
    %v305 = vpack.c.b16 %v296, %v295
    %v306 = vpack.c.b16 %v298, %v297
    %315 = vmatprep.subr.bf16.mxu0 0
    %316 = vmatpush1.bf16.msra.mxu0 %v299
    %317 = vmatprep.subr.bf16.mxu0 0
    %318 = vmatpush1.bf16.msra.mxu0 %v300
    %319 = vmatprep.subr.bf16.mxu0 0
    %320 = vmatpush1.bf16.msra.mxu0 %v301
    %321 = vmatprep.subr.bf16.mxu0 0
    %322 = vmatpush1.bf16.msra.mxu0 %v302
    %323 = vmatprep.subr.bf16.mxu0 0
    %324 = vmatpush1.bf16.msra.mxu0 %v303
    %325 = vmatprep.subr.bf16.mxu0 0
    %326 = vmatpush1.bf16.msra.mxu0 %v304
    %327 = vmatprep.subr.bf16.mxu0 0
    %328 = vmatpush1.bf16.msra.mxu0 %v305
    %329 = vmatprep.subr.bf16.mxu0 0
    %330 = vmatpush1.bf16.msra.mxu0 %v306
    %331 = vmatprep.subr.bf16.mxu0 0
    %332 = vmatpush1.bf16.msra.mxu0 0
    %333 = vmatprep.subr.bf16.mxu0 0
    %334 = vmatpush1.bf16.msra.mxu0 0
    %335 = vmatprep.subr.bf16.mxu0 0
    %336 = vmatpush1.bf16.msra.mxu0 0
    %337 = vmatprep.subr.bf16.mxu0 0
    %338 = vmatpush1.bf16.msra.mxu0 0
    %339 = vmatprep.subr.bf16.mxu0 0
    %340 = vmatpush1.bf16.msra.mxu0 0
    %341 = vmatprep.subr.bf16.mxu0 0
    %342 = vmatpush1.bf16.msra.mxu0 0
    %343 = vmatprep.subr.bf16.mxu0 0
    %344 = vmatpush1.bf16.msra.mxu0 0
    %345 = vmatprep.subr.bf16.mxu0 0
    %346 = vmatpush1.bf16.msra.mxu0 0
    %347 = vmatprep.mubr.bf16.mxu0 0
    %348 = vmatmul.mubr.bf16.gmra.mrb[0].mxu0 %v242
    %v349 = vpop.f32.mrb[0].mxu0
    %v350 = vadd.f32 %v265, %v349
    %v351 = vpop.f32.mrb[0].mxu0
    %v352 = vpop.f32.mrb[0].mxu0
    %v353 = vadd.f32 %v265, %v352
    %v354 = vpop.f32.mrb[0].mxu0
    %355 = vmatprep.mubr.bf16.mxu0 0
    %356 = vmatmul.mubr.bf16.gmra.mrb[0].mxu0 %v243
    %v357 = vpop.f32.mrb[0].mxu0
    %v358 = vadd.f32 %v265, %v357
    %v359 = vpop.f32.mrb[0].mxu0
    %v360 = vpop.f32.mrb[0].mxu0
    %v361 = vpop.f32.mrb[0].mxu0
    %362 = vdwg.mxu0
    %v363 = vmax.f32 %v350, 0.0
    %v364 = vmax.f32 %v353, 0.0
    %v365 = vmax.f32 %v358, 0.0
    %v366 = vpack.c.bf16 %v364, %v363
    %v367 = vpack.c.bf16 %v365, %v365
    %v368 = vld [vmem:[%s5] sm:$0xf]
    %v369 = vld [vmem:[%s5 + $0x4] sm:$0xf]
    %v370 = vld [vmem:[%s5 + $0x8] sm:$0xf]
    %v371 = vld [vmem:[%s5 + $0xc] sm:$0xf]
    %v372 = vld [vmem:[%s5 + $0x10] sm:$0xf]
    %v373 = vld [vmem:[%s5 + $0x14] sm:$0xf]
    %v374 = vld [vmem:[%s5 + $0x18] sm:$0xf]
    %v375 = vld [vmem:[%s5 + $0x1c] sm:$0xf]
    %v376 = vld [vmem:[%s6] sm:$0x1]
    %v378 = vlaneseq
    %v379 = vshrl.u32 %v378, 7
    %v380 = vsub.s32 0, %v379
    %v381 = vrot.slane %v376, %v380
    %v391 = vunpack.c.l.b16 %v368
    %v392 = vunpack.c.l.b16 %v369
    %v393 = vunpack.c.l.b16 %v370
    %v394 = vunpack.c.l.b16 %v371
    %v395 = vunpack.c.l.b16 %v372
    %v396 = vunpack.c.l.b16 %v373
    %v397 = vunpack.c.l.b16 %v374
    %v398 = vunpack.c.l.b16 %v375
    %v399 = vpack.c.b16 %v392, %v391
    %v400 = vpack.c.b16 %v394, %v393
    %v401 = vpack.c.b16 %v396, %v395
    %v402 = vpack.c.b16 %v398, %v397
    %vm407 = vcmask 523264
    %v409 = vsel %vm407, %v366, 0
    %v412 = vsel %vm407, %v367, 0
    %414 = vmatprep.subr.bf16.mxu0 0
    %415 = vmatpush1.bf16.msra.mxu0 %v399
    %416 = vmatprep.subr.bf16.mxu0 0
    %417 = vmatpush1.bf16.msra.mxu0 %v400
    %418 = vmatprep.subr.bf16.mxu0 0
    %419 = vmatpush1.bf16.msra.mxu0 %v401
    %420 = vmatprep.subr.bf16.mxu0 0
    %421 = vmatpush1.bf16.msra.mxu0 %v402
    %422 = vmatprep.subr.bf16.mxu0 0
    %423 = vmatpush1.bf16.msra.mxu0 0
    %424 = vmatprep.subr.bf16.mxu0 0
    %425 = vmatpush1.bf16.msra.mxu0 0
    %426 = vmatprep.subr.bf16.mxu0 0
    %427 = vmatpush1.bf16.msra.mxu0 0
    %428 = vmatprep.subr.bf16.mxu0 0
    %429 = vmatpush1.bf16.msra.mxu0 0
    %430 = vmatprep.subr.bf16.mxu0 0
    %431 = vmatpush1.bf16.msra.mxu0 0
    %432 = vmatprep.subr.bf16.mxu0 0
    %433 = vmatpush1.bf16.msra.mxu0 0
    %434 = vmatprep.subr.bf16.mxu0 0
    %435 = vmatpush1.bf16.msra.mxu0 0
    %436 = vmatprep.subr.bf16.mxu0 0
    %437 = vmatpush1.bf16.msra.mxu0 0
    %438 = vmatprep.subr.bf16.mxu0 0
    %439 = vmatpush1.bf16.msra.mxu0 0
    %440 = vmatprep.subr.bf16.mxu0 0
    %441 = vmatpush1.bf16.msra.mxu0 0
    %442 = vmatprep.subr.bf16.mxu0 0
    %443 = vmatpush1.bf16.msra.mxu0 0
    %444 = vmatprep.subr.bf16.mxu0 0
    %445 = vmatpush1.bf16.msra.mxu0 0
    %446 = vmatprep.mubr.bf16.mxu0 0
    %447 = vmatmul.mubr.bf16.gmra.mrb[0].mxu0 %v409
    %v448 = vpop.f32.mrb[0].mxu0
    %v449 = vadd.f32 %v381, %v448
    %v450 = vpop.f32.mrb[0].mxu0
    %v451 = vpop.f32.mrb[0].mxu0
    %v452 = vadd.f32 %v381, %v451
    %v453 = vpop.f32.mrb[0].mxu0
    %454 = vmatprep.mubr.bf16.mxu0 0
    %455 = vmatmul.mubr.bf16.gmra.mrb[0].mxu0 %v412
    %v456 = vpop.f32.mrb[0].mxu0
    %v457 = vadd.f32 %v381, %v456
    %v458 = vpop.f32.mrb[0].mxu0
    %v459 = vpop.f32.mrb[0].mxu0
    %v460 = vpop.f32.mrb[0].mxu0
    %461 = vdwg.mxu0
    %v462 = vsub.f32 0.0, %v449
    %v463 = vsub.f32 0.0, %v452
    %v464 = vsub.f32 0.0, %v457
    %v465 = vmul.f32 %v462, 1.442695
    %v466 = vpow.pop %v465
    %v467 = vmul.f32 %v463, 1.442695
    %v468 = vpow.pop %v467
    %v469 = vmul.f32 %v464, 1.442695
    %v470 = vpow.pop %v469
    %v471 = vadd.f32 %v466, 1.0
    %v472 = vadd.f32 %v468, 1.0
    %v473 = vadd.f32 %v470, 1.0
    %v474 = vrcp.pop %v471
    %v475 = vmul.f32 1.0, %v474
    %v476 = vrcp.pop %v472
    %v477 = vmul.f32 1.0, %v476
    %v478 = vrcp.pop %v473
    %v479 = vmul.f32 1.0, %v478
    %v480 = vpack.c.bf16 %v477, %v475
    %v481 = vpack.c.bf16 %v479, %v479
    %v482 = vld [vmem:[%s7] sm:$0xf]
    %v483 = vld [vmem:[%s7 + $0x4] sm:$0xf]
    %v484 = vld [vmem:[%s8] sm:$0x1]
    %v486 = vlaneseq
    %v487 = vshrl.u32 %v486, 7
    %v488 = vsub.s32 0, %v487
    %v489 = vrot.slane %v484, %v488
    %v493 = vunpack.c.l.b16 %v482
    %v494 = vunpack.c.l.b16 %v483
    %v495 = vpack.c.b16 %v494, %v493
    %vm497 = vcmask 130048
    %v499 = vsel %vm497, %v480, 0
    %v502 = vsel %vm497, %v481, 0
    %504 = vmatprep.subr.bf16.mxu0 0
    %505 = vmatpush1.bf16.msra.mxu0 %v495
    %506 = vmatprep.subr.bf16.mxu0 0
    %507 = vmatpush1.bf16.msra.mxu0 0
    %508 = vmatprep.subr.bf16.mxu0 0
    %509 = vmatpush1.bf16.msra.mxu0 0
    %510 = vmatprep.subr.bf16.mxu0 0
    %511 = vmatpush1.bf16.msra.mxu0 0
    %512 = vmatprep.subr.bf16.mxu0 0
    %513 = vmatpush1.bf16.msra.mxu0 0
    %514 = vmatprep.subr.bf16.mxu0 0
    %515 = vmatpush1.bf16.msra.mxu0 0
    %516 = vmatprep.subr.bf16.mxu0 0
    %517 = vmatpush1.bf16.msra.mxu0 0
    %518 = vmatprep.subr.bf16.mxu0 0
    %519 = vmatpush1.bf16.msra.mxu0 0
    %520 = vmatprep.subr.bf16.mxu0 0
    %521 = vmatpush1.bf16.msra.mxu0 0
    %522 = vmatprep.subr.bf16.mxu0 0
    %523 = vmatpush1.bf16.msra.mxu0 0
    %524 = vmatprep.subr.bf16.mxu0 0
    %525 = vmatpush1.bf16.msra.mxu0 0
    %526 = vmatprep.subr.bf16.mxu0 0
    %527 = vmatpush1.bf16.msra.mxu0 0
    %528 = vmatprep.subr.bf16.mxu0 0
    %529 = vmatpush1.bf16.msra.mxu0 0
    %530 = vmatprep.subr.bf16.mxu0 0
    %531 = vmatpush1.bf16.msra.mxu0 0
    %532 = vmatprep.subr.bf16.mxu0 0
    %533 = vmatpush1.bf16.msra.mxu0 0
    %534 = vmatprep.subr.bf16.mxu0 0
    %535 = vmatpush1.bf16.msra.mxu0 0
    %536 = vmatprep.mubr.bf16.mxu0 0
    %537 = vmatmul.mubr.bf16.gmra.mrb[0].mxu0 %v499
    %v538 = vpop.f32.mrb[0].mxu0
    %v539 = vadd.f32 %v489, %v538
    %v540 = vpop.f32.mrb[0].mxu0
    %v541 = vpop.f32.mrb[0].mxu0
    %v542 = vadd.f32 %v489, %v541
    %v543 = vpop.f32.mrb[0].mxu0
    %544 = vmatprep.mubr.bf16.mxu0 0
    %545 = vmatmul.mubr.bf16.gmra.mrb[0].mxu0 %v502
    %v546 = vpop.f32.mrb[0].mxu0
    %v547 = vadd.f32 %v489, %v546
    %v548 = vpop.f32.mrb[0].mxu0
    %v549 = vpop.f32.mrb[0].mxu0
    %v550 = vpop.f32.mrb[0].mxu0
    %551 = vdwg.mxu0
    %v552 = vmax.f32 %v539, 0.0
    %v553 = vmax.f32 %v542, 0.0
    %v554 = vmax.f32 %v547, 0.0
    %v555 = vpack.c.bf16 %v553, %v552
    %v556 = vpack.c.bf16 %v554, %v554
    %v557 = vld [vmem:[%s9] sm:$0xf]
    %v558 = vld [vmem:[%s9 + $0x4] sm:$0xf]
    %v559 = vld [vmem:[%s9 + $0x8] sm:$0xf]
    %v560 = vld [vmem:[%s9 + $0xc] sm:$0xf]
    %v561 = vld [vmem:[%s9 + $0x10] sm:$0xf]
    %v562 = vld [vmem:[%s9 + $0x14] sm:$0xf]
    %v563 = vld [vmem:[%s9 + $0x18] sm:$0xf]
    %v564 = vld [vmem:[%s9 + $0x1c] sm:$0xf]
    %v565 = vld [vmem:[%s10] sm:$0x1]
    %v567 = vlaneseq
    %v568 = vshrl.u32 %v567, 7
    %v569 = vsub.s32 0, %v568
    %v570 = vrot.slane %v565, %v569
    %v580 = vunpack.c.l.b16 %v557
    %v581 = vunpack.c.l.b16 %v558
    %v582 = vunpack.c.l.b16 %v559
    %v583 = vunpack.c.l.b16 %v560
    %v584 = vunpack.c.l.b16 %v561
    %v585 = vunpack.c.l.b16 %v562
    %v586 = vunpack.c.l.b16 %v563
    %v587 = vunpack.c.l.b16 %v564
    %v588 = vpack.c.b16 %v581, %v580
    %v589 = vpack.c.b16 %v583, %v582
    %v590 = vpack.c.b16 %v585, %v584
    %v591 = vpack.c.b16 %v587, %v586
    %v597 = vsel %vm407, %v555, 0
    %v600 = vsel %vm407, %v556, 0
    %602 = vmatprep.subr.bf16.mxu0 0
    %603 = vmatpush1.bf16.msra.mxu0 %v588
    %604 = vmatprep.subr.bf16.mxu0 0
    %605 = vmatpush1.bf16.msra.mxu0 %v589
    %606 = vmatprep.subr.bf16.mxu0 0
    %607 = vmatpush1.bf16.msra.mxu0 %v590
    %608 = vmatprep.subr.bf16.mxu0 0
    %609 = vmatpush1.bf16.msra.mxu0 %v591
    %610 = vmatprep.subr.bf16.mxu0 0
    %611 = vmatpush1.bf16.msra.mxu0 0
    %612 = vmatprep.subr.bf16.mxu0 0
    %613 = vmatpush1.bf16.msra.mxu0 0
    %614 = vmatprep.subr.bf16.mxu0 0
    %615 = vmatpush1.bf16.msra.mxu0 0
    %616 = vmatprep.subr.bf16.mxu0 0
    %617 = vmatpush1.bf16.msra.mxu0 0
    %618 = vmatprep.subr.bf16.mxu0 0
    %619 = vmatpush1.bf16.msra.mxu0 0
    %620 = vmatprep.subr.bf16.mxu0 0
    %621 = vmatpush1.bf16.msra.mxu0 0
    %622 = vmatprep.subr.bf16.mxu0 0
    %623 = vmatpush1.bf16.msra.mxu0 0
    %624 = vmatprep.subr.bf16.mxu0 0
    %625 = vmatpush1.bf16.msra.mxu0 0
    %626 = vmatprep.subr.bf16.mxu0 0
    %627 = vmatpush1.bf16.msra.mxu0 0
    %628 = vmatprep.subr.bf16.mxu0 0
    %629 = vmatpush1.bf16.msra.mxu0 0
    %630 = vmatprep.subr.bf16.mxu0 0
    %631 = vmatpush1.bf16.msra.mxu0 0
    %632 = vmatprep.subr.bf16.mxu0 0
    %633 = vmatpush1.bf16.msra.mxu0 0
    %634 = vmatprep.mubr.bf16.mxu0 0
    %635 = vmatmul.mubr.bf16.gmra.mrb[0].mxu0 %v597
    %v636 = vpop.f32.mrb[0].mxu0
    %v637 = vadd.f32 %v570, %v636
    %v638 = vpop.f32.mrb[0].mxu0
    %v639 = vpop.f32.mrb[0].mxu0
    %v640 = vadd.f32 %v570, %v639
    %v641 = vpop.f32.mrb[0].mxu0
    %642 = vmatprep.mubr.bf16.mxu0 0
    %643 = vmatmul.mubr.bf16.gmra.mrb[0].mxu0 %v600
    %v644 = vpop.f32.mrb[0].mxu0
    %v645 = vadd.f32 %v570, %v644
    %v646 = vpop.f32.mrb[0].mxu0
    %v647 = vpop.f32.mrb[0].mxu0
    %v648 = vpop.f32.mrb[0].mxu0
    %649 = vdwg.mxu0
    %v650 = vmax.f32 %v637, 0.0
    %v651 = vmax.f32 %v640, 0.0
    %v652 = vmax.f32 %v645, 0.0
    %v653 = vpack.c.bf16 %v651, %v650
    %v654 = vpack.c.bf16 %v652, %v652
    %v655 = vld [vmem:[%s11] sm:$0xff]
    %v656 = vld [vmem:[%s11 + $0x8] sm:$0xff]
    %v657 = vld [vmem:[%s11 + $0x10] sm:$0xff]
    %v658 = vld [vmem:[%s11 + $0x18] sm:$0xff]
    %v659 = vld [vmem:[%s11 + $0x20] sm:$0xff]
    %v660 = vld [vmem:[%s11 + $0x28] sm:$0xff]
    %v661 = vld [vmem:[%s11 + $0x30] sm:$0xff]
    %v662 = vld [vmem:[%s11 + $0x38] sm:$0xff]
    %v663 = vld [vmem:[%s11 + $0x40] sm:$0xff]
    %v664 = vld [vmem:[%s11 + $0x48] sm:$0xff]
    %v665 = vld [vmem:[%s11 + $0x50] sm:$0xff]
    %v666 = vld [vmem:[%s11 + $0x58] sm:$0xff]
    %v667 = vld [vmem:[%s11 + $0x60] sm:$0xff]
    %v668 = vld [vmem:[%s11 + $0x68] sm:$0xff]
    %v669 = vld [vmem:[%s11 + $0x70] sm:$0xff]
    %v670 = vld [vmem:[%s11 + $0x78] sm:$0xff]
    %v671 = vld [vmem:[%s12] sm:$0x3]
    %v673 = vlaneseq
    %v674 = vshrl.u32 %v673, 7
    %v675 = vsub.s32 0, %v674
    %v676 = vrot.slane %v671, %v675
    %v677 = vlaneseq
    %v678 = vshrl.u32 %v677, 7
    %v679 = vsub.s32 1, %v678
    %v680 = vrot.slane %v671, %v679
    %v699 = vunpack.c.l.b16 %v655
    %v700 = vunpack.c.h.b16 %v655
    %v701 = vunpack.c.l.b16 %v656
    %v702 = vunpack.c.h.b16 %v656
    %v703 = vunpack.c.l.b16 %v657
    %v704 = vunpack.c.h.b16 %v657
    %v705 = vunpack.c.l.b16 %v658
    %v706 = vunpack.c.h.b16 %v658
    %v707 = vunpack.c.l.b16 %v659
    %v708 = vunpack.c.h.b16 %v659
    %v709 = vunpack.c.l.b16 %v660
    %v710 = vunpack.c.h.b16 %v660
    %v711 = vunpack.c.l.b16 %v661
    %v712 = vunpack.c.h.b16 %v661
    %v713 = vunpack.c.l.b16 %v662
    %v714 = vunpack.c.h.b16 %v662
    %v715 = vunpack.c.l.b16 %v663
    %v716 = vunpack.c.h.b16 %v663
    %v717 = vunpack.c.l.b16 %v664
    %v718 = vunpack.c.h.b16 %v664
    %v719 = vunpack.c.l.b16 %v665
    %v720 = vunpack.c.h.b16 %v665
    %v721 = vunpack.c.l.b16 %v666
    %v722 = vunpack.c.h.b16 %v666
    %v723 = vunpack.c.l.b16 %v667
    %v724 = vunpack.c.h.b16 %v667
    %v725 = vunpack.c.l.b16 %v668
    %v726 = vunpack.c.h.b16 %v668
    %v727 = vunpack.c.l.b16 %v669
    %v728 = vunpack.c.h.b16 %v669
    %v729 = vunpack.c.l.b16 %v670
    %v730 = vunpack.c.h.b16 %v670
    %v731 = vpack.c.b16 %v701, %v699
    %v732 = vpack.c.b16 %v702, %v700
    %v733 = vpack.c.b16 %v705, %v703
    %v734 = vpack.c.b16 %v706, %v704
    %v735 = vpack.c.b16 %v709, %v707
    %v736 = vpack.c.b16 %v710, %v708
    %v737 = vpack.c.b16 %v713, %v711
    %v738 = vpack.c.b16 %v714, %v712
    %v739 = vpack.c.b16 %v717, %v715
    %v740 = vpack.c.b16 %v718, %v716
    %v741 = vpack.c.b16 %v721, %v719
    %v742 = vpack.c.b16 %v722, %v720
    %v743 = vpack.c.b16 %v725, %v723
    %v744 = vpack.c.b16 %v726, %v724
    %v745 = vpack.c.b16 %v729, %v727
    %v746 = vpack.c.b16 %v730, %v728
    %763 = vmatprep.subr.bf16.mxu0 %v732
    %764 = vmatpush1.bf16.msra.mxu0 %v731
    %765 = vmatprep.subr.bf16.mxu0 %v734
    %766 = vmatpush1.bf16.msra.mxu0 %v733
    %767 = vmatprep.subr.bf16.mxu0 %v736
    %768 = vmatpush1.bf16.msra.mxu0 %v735
    %769 = vmatprep.subr.bf16.mxu0 %v738
    %770 = vmatpush1.bf16.msra.mxu0 %v737
    %771 = vmatprep.subr.bf16.mxu0 %v740
    %772 = vmatpush1.bf16.msra.mxu0 %v739
    %773 = vmatprep.subr.bf16.mxu0 %v742
    %774 = vmatpush1.bf16.msra.mxu0 %v741
    %775 = vmatprep.subr.bf16.mxu0 %v744
    %776 = vmatpush1.bf16.msra.mxu0 %v743
    %777 = vmatprep.subr.bf16.mxu0 %v746
    %778 = vmatpush1.bf16.msra.mxu0 %v745
    %779 = vmatprep.subr.bf16.mxu0 0
    %780 = vmatpush1.bf16.msra.mxu0 0
    %781 = vmatprep.subr.bf16.mxu0 0
    %782 = vmatpush1.bf16.msra.mxu0 0
    %783 = vmatprep.subr.bf16.mxu0 0
    %784 = vmatpush1.bf16.msra.mxu0 0
    %785 = vmatprep.subr.bf16.mxu0 0
    %786 = vmatpush1.bf16.msra.mxu0 0
    %787 = vmatprep.subr.bf16.mxu0 0
    %788 = vmatpush1.bf16.msra.mxu0 0
    %789 = vmatprep.subr.bf16.mxu0 0
    %790 = vmatpush1.bf16.msra.mxu0 0
    %791 = vmatprep.subr.bf16.mxu0 0
    %792 = vmatpush1.bf16.msra.mxu0 0
    %793 = vmatprep.subr.bf16.mxu0 0
    %794 = vmatpush1.bf16.msra.mxu0 0
    %795 = vmatprep.mubr.bf16.mxu0 0
    %796 = vmatmul.mubr.bf16.gmra.mrb[0].mxu0 %v653
    %v797 = vpop.f32.mrb[0].mxu0
    %v798 = vadd.f32 %v676, %v797
    %v799 = vpop.f32.mrb[0].mxu0
    %v800 = vadd.f32 %v680, %v799
    %v801 = vpop.f32.mrb[0].mxu0
    %v802 = vadd.f32 %v676, %v801
    %v803 = vpop.f32.mrb[0].mxu0
    %v804 = vadd.f32 %v680, %v803
    %805 = vmatprep.mubr.bf16.mxu0 0
    %806 = vmatmul.mubr.bf16.gmra.mrb[0].mxu0 %v654
    %v807 = vpop.f32.mrb[0].mxu0
    %v808 = vadd.f32 %v676, %v807
    %v809 = vpop.f32.mrb[0].mxu0
    %v810 = vadd.f32 %v680, %v809
    %v811 = vpop.f32.mrb[0].mxu0
    %v812 = vpop.f32.mrb[0].mxu0
    %813 = vdwg.mxu0
    %814 = vst [vmem:[#allocation2] sm:$0xff] %v798
    %815 = vst [vmem:[#allocation2 + $0x8] sm:$0xff] %v800
    %816 = vst [vmem:[#allocation2 + $0x10] sm:$0xff] %v802
    %817 = vst [vmem:[#allocation2 + $0x18] sm:$0xff] %v804
    %818 = vst [vmem:[#allocation2 + $0x20] sm:$0xff] %v808
    %819 = vst [vmem:[#allocation2 + $0x28] sm:$0xff] %v810
    // Predicated region
    $region54: #{ae_forward.1} parent=1 // pred_check
      _
    $region55: #{ae_forward.1} parent=1 // pred_check_branch
      %821 = sbr.rel (0) target = $region57
    $region56: #{ae_forward.1} parent=1 // pred_region
      %s823 = ssub.s32 768, 768
      %824 = vsyncadd [#allocation3], %s823
      %s825 = sshll.u32 [#allocation2], 4
      %s826 = int_to_ptr.vmem [resolvable:$true] %s825
      %831 = dma.vmem_to_hbm [thread:$0]  %s826, 768, %s13, [#allocation3], 256, 256, 16
    $region57: #{ae_forward.1} parent=1 // pred_fallthru
      _
    // Predicated region
    $region58: #{ae_forward.1} parent=1 // pred_check
      _
    $region59: #{ae_forward.1} parent=1 // pred_check_branch
      %833 = sbr.rel (0) target = $region61
    $region60: #{ae_forward.1} parent=1 // pred_region
      %834 = dma.done [#allocation3], 768
    $region61: #{ae_forward.1} parent=1 // pred_fallthru
      _
    %835 = vsyncpa [#allocation3], 1

</llo_original>
